<compile_context>
chip_gen: v7x
topology: tpu7x:2x2x1
jax: 0.10.0
libtpu: 0.0.40
codegen_flags: <defaults>
</compile_context>

<pallas_src>
import jax
import jax.numpy as jnp
from jax.experimental import pallas as pl
from jax.experimental.pallas import tpu as pltpu


_SUB = 8            # sublanes per vreg: batch is packed (sublane, lane)
_LANE_BLOCK = 512   # lanes per grid step for large batches
_BATCH_BLOCK = _SUB * _LANE_BLOCK   # 4096 matrices per grid step


def cayley3_kernel(x_ref, o_ref):
    """Y = 2 (I + x)^{-1} - I  (== solve(I + x, I - x)) for packed 3x3 batches.

    Layout: x_ref / o_ref are (72, Nb).  Row-block k = 3*i + j (8 sublanes)
    holds element (i, j) of 8*Nb matrices; matrix n = s*Nb_total + l lives at
    sublane s, lane l.  Every element is therefore a dense (8, Nb) tile and
    all arithmetic below is full-vreg VPU elementwise work.
    """
    f32 = jnp.float32
    x = x_ref[...].astype(f32)        # f32 compute even for bf16 inputs (v5e)

    def elem(k):                      # (8, Nb) tile of element k = 3*i + j
        return x[8 * k:8 * (k + 1), :]

    x00, x01, x02 = elem(0), elem(1), elem(2)
    x10, x11, x12 = elem(3), elem(4), elem(5)
    x20, x21, x22 = elem(6), elem(7), elem(8)

    one = f32(1.0)
    # A = I + x: identity folded straight onto the diagonal tiles (no iota/eye).
    a00 = x00 + one; a01 = x01;       a02 = x02
    a10 = x10;       a11 = x11 + one; a12 = x12
    a20 = x20;       a21 = x21;       a22 = x22 + one

    # Cofactors C[i, j] of A;  adj(A) = C^T;  A^{-1} = C^T / det(A).
    c00 = a11 * a22 - a12 * a21
    c01 = a12 * a20 - a10 * a22
    c02 = a10 * a21 - a11 * a20
    c10 = a02 * a21 - a01 * a22
    c11 = a00 * a22 - a02 * a20
    c12 = a01 * a20 - a00 * a21
    c20 = a01 * a12 - a02 * a11
    c21 = a02 * a10 - a00 * a12
    c22 = a00 * a11 - a01 * a10

    det = a00 * c00 + a01 * c01 + a02 * c02
    # EUP reciprocal (exact); singular (I + x) -> inf/nan, not a raise.
    two_inv_det = 2.0 * pl.reciprocal(det, approx=False)

    # Y = 2 A^{-1} - I, so Y[i, j] = 2 C[j, i] / det - delta_ij.
    y = (two_inv_det * c00 - one, two_inv_det * c10,       two_inv_det * c20,
         two_inv_det * c01,       two_inv_det * c11 - one, two_inv_det * c21,
         two_inv_det * c02,       two_inv_det * c12,       two_inv_det * c22 - one)

    # Nine 8-sublane-aligned, lane-dense stores -> unmasked vst on all gens.
    for k in range(9):
        o_ref[8 * k:8 * (k + 1), :] = y[k].astype(o_ref.dtype)


def _cayley_packed(x72):
    """Run the kernel on a (72, nb) packed batch; returns same layout."""
    nb = x72.shape[1]
    if nb <= _LANE_BLOCK:
        # Small batch: whole array resident in VMEM, no grid loop.
        return pl.pallas_call(
            cayley3_kernel,
            out_shape=jax.ShapeDtypeStruct(x72.shape, x72.dtype),
            in_specs=[pl.BlockSpec(memory_space=pltpu.MemorySpace.VMEM)],
            out_specs=pl.BlockSpec(memory_space=pltpu.MemorySpace.VMEM),
        )(x72)

    assert nb % _LANE_BLOCK == 0
    grid = (nb // _LANE_BLOCK,)
    return pl.pallas_call(
        cayley3_kernel,
        out_shape=jax.ShapeDtypeStruct(x72.shape, x72.dtype),
        grid_spec=pltpu.PrefetchScalarGridSpec(
            num_scalar_prefetch=0,
            grid=grid,
            in_specs=[pl.BlockSpec((72, _LANE_BLOCK), lambda i: (0, i))],
            out_specs=pl.BlockSpec((72, _LANE_BLOCK), lambda i: (0, i)),
        ),
        # "parallel" lets v7x's two TensorCores split the batch axis; the
        # (72, 512) f32 blocks keep double-buffered in+out well under the
        # 32 MiB scoped-VMEM default on every generation.
        compiler_params=pltpu.CompilerParams(
            dimension_semantics=("parallel",)),
    )(x72)


def _pack(xs):
    """(B, 3, 3) -> ((72, nb) packed layout, nb, original B)."""
    b = xs.shape[0]
    if b <= _BATCH_BLOCK:
        nb = max(pl.cdiv(b, _SUB), 1)
    else:
        nb = pl.cdiv(b, _BATCH_BLOCK) * _LANE_BLOCK
    bp = _SUB * nb
    if bp != b:
        # Zero padding is safe: x = 0 -> A = I -> det = 1 (no inf/nan).
        xs = jnp.pad(xs, ((0, bp - b), (0, 0), (0, 0)))
    # packed[(3*i + j)*8 + s, l] = xs[s*nb + l, i, j]
    packed = xs.reshape(_SUB, nb, 3, 3).transpose(2, 3, 0, 1).reshape(72, nb)
    return packed, nb, b


def _unpack(y72, nb, b):
    y = y72.reshape(3, 3, _SUB, nb).transpose(2, 3, 0, 1)
    return y.reshape(_SUB * nb, 3, 3)[:b]


def cayley_map_batched(xs):
    """Cayley map applied independently to a (B, 3, 3) stack of matrices."""
    assert xs.ndim == 3 and xs.shape[1:] == (3, 3)
    packed, nb, b = _pack(xs)
    return _unpack(_cayley_packed(packed), nb, b)


def cayley_map(x):
    """CayleyMap.forward for one 3x3 weight: solve(I + x, I - x)."""
    assert x.shape == (3, 3), "this kernel is specialized for the 3x3 module"
    return cayley_map_batched(x[None])[0]


if __name__ == "__main__":
    key = jax.random.PRNGKey(0)
    k1, k2, k3 = jax.random.split(key, 3)
    eye = jnp.eye(3, dtype=jnp.float32)

    # Module-exact case: single nn.Linear(3, 3).weight, x = torch.rand_like(w).
    x = jax.random.uniform(k1, (3, 3), dtype=jnp.float32)
    y = jax.block_until_ready(cayley_map(x))
    ref = jnp.linalg.solve(eye + x, eye - x)
    assert jnp.allclose(y, ref, rtol=1e-4, atol=1e-5), (y, ref)

    # Small batched case (gridless path).
    xb = jax.random.uniform(k2, (32, 3, 3), dtype=jnp.float32)
    yb = jax.block_until_ready(cayley_map_batched(xb))
    refb = jnp.linalg.solve(eye[None] + xb, eye[None] - xb)
    assert jnp.allclose(yb, refb, rtol=1e-4, atol=1e-5)

    # Larger batch exercising the gridded, lane-blocked, "parallel" path
    # (non-multiple size also checks the padding logic).
    xg = jax.random.uniform(k3, (8200, 3, 3), dtype=jnp.float32)
    yg = jax.block_until_ready(cayley_map_batched(xg))
    refg = jnp.linalg.solve(eye[None] + xg, eye[None] - xg)
    assert jnp.allclose(yg, refg, rtol=1e-4, atol=1e-5)

    print("KERNEL_OK")
</pallas_src>

<mosaic_0001>
module attributes {stable_mosaic.version = 11 : i64} {
  func.func @cayley3_kernel(%arg0: memref<72x1xf32, #tpu.memory_space<vmem>>, %arg1: memref<72x1xf32, #tpu.memory_space<vmem>>) attributes {dimension_semantics = [], scalar_prefetch = 0 : i64, scratch_operands = 0 : i64, tpu.core_type = #tpu.core_type<tc>} {
    %c0 = arith.constant 0 : index
    %c0_0 = arith.constant 0 : index
    %0 = vector.load %arg0[%c0, %c0_0] : memref<72x1xf32, #tpu.memory_space<vmem>>, vector<72x1xf32>
    %1 = vector.extract_strided_slice %0 {offsets = [0, 0], sizes = [8, 1], strides = [1, 1]} : vector<72x1xf32> to vector<8x1xf32>
    %2 = vector.extract_strided_slice %0 {offsets = [8, 0], sizes = [8, 1], strides = [1, 1]} : vector<72x1xf32> to vector<8x1xf32>
    %3 = vector.extract_strided_slice %0 {offsets = [16, 0], sizes = [8, 1], strides = [1, 1]} : vector<72x1xf32> to vector<8x1xf32>
    %4 = vector.extract_strided_slice %0 {offsets = [24, 0], sizes = [8, 1], strides = [1, 1]} : vector<72x1xf32> to vector<8x1xf32>
    %5 = vector.extract_strided_slice %0 {offsets = [32, 0], sizes = [8, 1], strides = [1, 1]} : vector<72x1xf32> to vector<8x1xf32>
    %6 = vector.extract_strided_slice %0 {offsets = [40, 0], sizes = [8, 1], strides = [1, 1]} : vector<72x1xf32> to vector<8x1xf32>
    %7 = vector.extract_strided_slice %0 {offsets = [48, 0], sizes = [8, 1], strides = [1, 1]} : vector<72x1xf32> to vector<8x1xf32>
    %8 = vector.extract_strided_slice %0 {offsets = [56, 0], sizes = [8, 1], strides = [1, 1]} : vector<72x1xf32> to vector<8x1xf32>
    %9 = vector.extract_strided_slice %0 {offsets = [64, 0], sizes = [8, 1], strides = [1, 1]} : vector<72x1xf32> to vector<8x1xf32>
    %cst = arith.constant 1.000000e+00 : f32
    %10 = vector.broadcast %cst : f32 to vector<8x1xf32>
    %11 = arith.addf %1, %10 : vector<8x1xf32>
    %cst_1 = arith.constant 1.000000e+00 : f32
    %12 = vector.broadcast %cst_1 : f32 to vector<8x1xf32>
    %13 = arith.addf %5, %12 : vector<8x1xf32>
    %cst_2 = arith.constant 1.000000e+00 : f32
    %14 = vector.broadcast %cst_2 : f32 to vector<8x1xf32>
    %15 = arith.addf %9, %14 : vector<8x1xf32>
    %16 = arith.mulf %13, %15 : vector<8x1xf32>
    %17 = arith.mulf %6, %8 : vector<8x1xf32>
    %18 = arith.subf %16, %17 : vector<8x1xf32>
    %19 = arith.mulf %6, %7 : vector<8x1xf32>
    %20 = arith.mulf %4, %15 : vector<8x1xf32>
    %21 = arith.subf %19, %20 : vector<8x1xf32>
    %22 = arith.mulf %4, %8 : vector<8x1xf32>
    %23 = arith.mulf %13, %7 : vector<8x1xf32>
    %24 = arith.subf %22, %23 : vector<8x1xf32>
    %25 = arith.mulf %3, %8 : vector<8x1xf32>
    %26 = arith.mulf %2, %15 : vector<8x1xf32>
    %27 = arith.subf %25, %26 : vector<8x1xf32>
    %28 = arith.mulf %11, %15 : vector<8x1xf32>
    %29 = arith.mulf %3, %7 : vector<8x1xf32>
    %30 = arith.subf %28, %29 : vector<8x1xf32>
    %31 = arith.mulf %2, %7 : vector<8x1xf32>
    %32 = arith.mulf %11, %8 : vector<8x1xf32>
    %33 = arith.subf %31, %32 : vector<8x1xf32>
    %34 = arith.mulf %2, %6 : vector<8x1xf32>
    %35 = arith.mulf %3, %13 : vector<8x1xf32>
    %36 = arith.subf %34, %35 : vector<8x1xf32>
    %37 = arith.mulf %3, %4 : vector<8x1xf32>
    %38 = arith.mulf %11, %6 : vector<8x1xf32>
    %39 = arith.subf %37, %38 : vector<8x1xf32>
    %40 = arith.mulf %11, %13 : vector<8x1xf32>
    %41 = arith.mulf %2, %4 : vector<8x1xf32>
    %42 = arith.subf %40, %41 : vector<8x1xf32>
    %43 = arith.mulf %11, %18 : vector<8x1xf32>
    %44 = arith.mulf %2, %21 : vector<8x1xf32>
    %45 = arith.addf %43, %44 : vector<8x1xf32>
    %46 = arith.mulf %3, %24 : vector<8x1xf32>
    %47 = arith.addf %45, %46 : vector<8x1xf32>
    %48 = tpu.reciprocal %47 : vector<8x1xf32> -> vector<8x1xf32>
    %cst_3 = arith.constant 2.000000e+00 : f32
    %49 = vector.broadcast %cst_3 : f32 to vector<8x1xf32>
    %50 = arith.mulf %49, %48 : vector<8x1xf32>
    %51 = arith.mulf %50, %18 : vector<8x1xf32>
    %cst_4 = arith.constant 1.000000e+00 : f32
    %52 = vector.broadcast %cst_4 : f32 to vector<8x1xf32>
    %53 = arith.subf %51, %52 : vector<8x1xf32>
    %54 = arith.mulf %50, %27 : vector<8x1xf32>
    %55 = arith.mulf %50, %36 : vector<8x1xf32>
    %56 = arith.mulf %50, %21 : vector<8x1xf32>
    %57 = arith.mulf %50, %30 : vector<8x1xf32>
    %cst_5 = arith.constant 1.000000e+00 : f32
    %58 = vector.broadcast %cst_5 : f32 to vector<8x1xf32>
    %59 = arith.subf %57, %58 : vector<8x1xf32>
    %60 = arith.mulf %50, %39 : vector<8x1xf32>
    %61 = arith.mulf %50, %24 : vector<8x1xf32>
    %62 = arith.mulf %50, %33 : vector<8x1xf32>
    %63 = arith.mulf %50, %42 : vector<8x1xf32>
    %cst_6 = arith.constant 1.000000e+00 : f32
    %64 = vector.broadcast %cst_6 : f32 to vector<8x1xf32>
    %65 = arith.subf %63, %64 : vector<8x1xf32>
    %c0_7 = arith.constant 0 : index
    %c0_8 = arith.constant 0 : index
    %66 = vector.load %arg1[%c0_7, %c0_8] : memref<72x1xf32, #tpu.memory_space<vmem>>, vector<8x1xf32>
    tpu.vector_store %arg1[%c0_7, %c0_8], %53 {strides = array<i32>} : memref<72x1xf32, #tpu.memory_space<vmem>>, vector<8x1xf32>,
    %c8 = arith.constant 8 : index
    %c0_9 = arith.constant 0 : index
    %67 = vector.load %arg1[%c8, %c0_9] : memref<72x1xf32, #tpu.memory_space<vmem>>, vector<8x1xf32>
    tpu.vector_store %arg1[%c8, %c0_9], %54 {strides = array<i32>} : memref<72x1xf32, #tpu.memory_space<vmem>>, vector<8x1xf32>,
    %c16 = arith.constant 16 : index
    %c0_10 = arith.constant 0 : index
    %68 = vector.load %arg1[%c16, %c0_10] : memref<72x1xf32, #tpu.memory_space<vmem>>, vector<8x1xf32>
    tpu.vector_store %arg1[%c16, %c0_10], %55 {strides = array<i32>} : memref<72x1xf32, #tpu.memory_space<vmem>>, vector<8x1xf32>,
    %c24 = arith.constant 24 : index
    %c0_11 = arith.constant 0 : index
    %69 = vector.load %arg1[%c24, %c0_11] : memref<72x1xf32, #tpu.memory_space<vmem>>, vector<8x1xf32>
    tpu.vector_store %arg1[%c24, %c0_11], %56 {strides = array<i32>} : memref<72x1xf32, #tpu.memory_space<vmem>>, vector<8x1xf32>,
    %c32 = arith.constant 32 : index
    %c0_12 = arith.constant 0 : index
    %70 = vector.load %arg1[%c32, %c0_12] : memref<72x1xf32, #tpu.memory_space<vmem>>, vector<8x1xf32>
    tpu.vector_store %arg1[%c32, %c0_12], %59 {strides = array<i32>} : memref<72x1xf32, #tpu.memory_space<vmem>>, vector<8x1xf32>,
    %c40 = arith.constant 40 : index
    %c0_13 = arith.constant 0 : index
    %71 = vector.load %arg1[%c40, %c0_13] : memref<72x1xf32, #tpu.memory_space<vmem>>, vector<8x1xf32>
    tpu.vector_store %arg1[%c40, %c0_13], %60 {strides = array<i32>} : memref<72x1xf32, #tpu.memory_space<vmem>>, vector<8x1xf32>,
    %c48 = arith.constant 48 : index
    %c0_14 = arith.constant 0 : index
    %72 = vector.load %arg1[%c48, %c0_14] : memref<72x1xf32, #tpu.memory_space<vmem>>, vector<8x1xf32>
    tpu.vector_store %arg1[%c48, %c0_14], %61 {strides = array<i32>} : memref<72x1xf32, #tpu.memory_space<vmem>>, vector<8x1xf32>,
    %c56 = arith.constant 56 : index
    %c0_15 = arith.constant 0 : index
    %73 = vector.load %arg1[%c56, %c0_15] : memref<72x1xf32, #tpu.memory_space<vmem>>, vector<8x1xf32>
    tpu.vector_store %arg1[%c56, %c0_15], %62 {strides = array<i32>} : memref<72x1xf32, #tpu.memory_space<vmem>>, vector<8x1xf32>,
    %c64 = arith.constant 64 : index
    %c0_16 = arith.constant 0 : index
    %74 = vector.load %arg1[%c64, %c0_16] : memref<72x1xf32, #tpu.memory_space<vmem>>, vector<8x1xf32>
    tpu.vector_store %arg1[%c64, %c0_16], %65 {strides = array<i32>} : memref<72x1xf32, #tpu.memory_space<vmem>>, vector<8x1xf32>,
    return
  }
}

</mosaic_0001>

<llo_original>
// kernel: tpu_custom_call.1
$region0: #{tpu_custom_call.1}
  #allocation0 [shape = 'u32[]', space=smem, size = 0x4, offset = 0x4, fixed_abs, tag = 'smem constant byte address 0x4 - core index']
  #allocation1 [shape = 'u32[144,128]{1,0:T(1,128)}', space=vmem, size = 0x12000, scoped, tag = 'internal scratch']
  %s0 = inlined_call_operand.vmem [shape: f32[72,1], index: 0, kind: input, shape index: {}]
  %s1 = inlined_call_operand.vmem [shape: f32[72,1], index: 1, kind: output, shape index: {}]
  %s2 = sld [smem:[#allocation0]]
  $region14: #{tpu_custom_call.1} parent=0
    _
  %s4 = ssub.s32 1, %s2
  %s5 = scalar_select 0, %s4, %s2
  // Predicated region
  $region2: #{tpu_custom_call.1} parent=0 // pred_check
    _
  $region3: #{tpu_custom_call.1} parent=0 // pred_check_branch
    %7 = sbr.rel (0) target = $region5
  $region4: #{tpu_custom_call.1} parent=0 // pred_region
    _
  $region5: #{tpu_custom_call.1} parent=0 // pred_fallthru
    _
  %v8 = vld [vmem:[%s0] sm:$0xff]
  %v9 = vld [vmem:[%s0 + $0x8] sm:$0xff]
  %v10 = vld [vmem:[%s0 + $0x10] sm:$0xff]
  %v11 = vld [vmem:[%s0 + $0x18] sm:$0xff]
  %v12 = vld [vmem:[%s0 + $0x20] sm:$0xff]
  %v13 = vld [vmem:[%s0 + $0x28] sm:$0xff]
  %v14 = vld [vmem:[%s0 + $0x30] sm:$0xff]
  %v15 = vld [vmem:[%s0 + $0x38] sm:$0xff]
  %v16 = vld [vmem:[%s0 + $0x40] sm:$0xff]
  %v17 = vadd.f32 %v8, 1.0
  %v18 = vadd.f32 %v12, 1.0
  %v19 = vadd.f32 %v16, 1.0
  %v20 = vmul.f32 %v18, %v19
  %v21 = vmul.f32 %v13, %v15
  %v22 = vsub.f32 %v20, %v21
  %v23 = vmul.f32 %v13, %v14
  %v24 = vmul.f32 %v11, %v19
  %v25 = vsub.f32 %v23, %v24
  %v26 = vmul.f32 %v11, %v15
  %v27 = vmul.f32 %v18, %v14
  %v28 = vsub.f32 %v26, %v27
  %v29 = vmul.f32 %v10, %v15
  %v30 = vmul.f32 %v9, %v19
  %v31 = vsub.f32 %v29, %v30
  %v32 = vmul.f32 %v17, %v19
  %v33 = vmul.f32 %v10, %v14
  %v34 = vsub.f32 %v32, %v33
  %v35 = vmul.f32 %v9, %v14
  %v36 = vmul.f32 %v17, %v15
  %v37 = vsub.f32 %v35, %v36
  %v38 = vmul.f32 %v9, %v13
  %v39 = vmul.f32 %v10, %v18
  %v40 = vsub.f32 %v38, %v39
  %v41 = vmul.f32 %v10, %v11
  %v42 = vmul.f32 %v17, %v13
  %v43 = vsub.f32 %v41, %v42
  %v44 = vmul.f32 %v17, %v18
  %v45 = vmul.f32 %v9, %v11
  %v46 = vsub.f32 %v44, %v45
  %v47 = vmul.f32 %v17, %v22
  %v48 = vmul.f32 %v9, %v25
  %v49 = vadd.f32 %v47, %v48
  %v50 = vmul.f32 %v10, %v28
  %v51 = vadd.f32 %v49, %v50
  %v52 = vrcp.pop %v51
  %v53 = vmul.f32 %v52, 2.0
  %v54 = vmul.f32 %v53, %v22
  %v55 = vsub.f32 %v54, 1.0
  %v56 = vmul.f32 %v53, %v31
  %v57 = vmul.f32 %v53, %v40
  %v58 = vmul.f32 %v53, %v25
  %v59 = vmul.f32 %v53, %v34
  %v60 = vsub.f32 %v59, 1.0
  %v61 = vmul.f32 %v53, %v43
  %v62 = vmul.f32 %v53, %v28
  %v63 = vmul.f32 %v53, %v37
  %v64 = vmul.f32 %v53, %v46
  %v65 = vsub.f32 %v64, 1.0
  %vm66 = vcmask 7168
  %67 = vst.msk [vmem:[%s1] sm:$0xff] %vm66, %v55
  %68 = vst.msk [vmem:[%s1 + $0x8] sm:$0xff] %vm66, %v56
  %69 = vst.msk [vmem:[%s1 + $0x10] sm:$0xff] %vm66, %v57
  %70 = vst.msk [vmem:[%s1 + $0x18] sm:$0xff] %vm66, %v58
  %71 = vst.msk [vmem:[%s1 + $0x20] sm:$0xff] %vm66, %v60
  %72 = vst.msk [vmem:[%s1 + $0x28] sm:$0xff] %vm66, %v61
  %73 = vst.msk [vmem:[%s1 + $0x30] sm:$0xff] %vm66, %v62
  %74 = vst.msk [vmem:[%s1 + $0x38] sm:$0xff] %vm66, %v63
  %75 = vst.msk [vmem:[%s1 + $0x40] sm:$0xff] %vm66, %v65
  // Predicated region
  $region6: #{tpu_custom_call.1} parent=0 // pred_check
    _
  $region7: #{tpu_custom_call.1} parent=0 // pred_check_branch
    %77 = sbr.rel (0) target = $region9
  $region8: #{tpu_custom_call.1} parent=0 // pred_region
    _
  $region9: #{tpu_custom_call.1} parent=0 // pred_fallthru
    _
  // Predicated region
  $region10: #{tpu_custom_call.1} parent=0 // pred_check
    _
  $region11: #{tpu_custom_call.1} parent=0 // pred_check_branch
    %79 = sbr.rel (0) target = $region13
  $region12: #{tpu_custom_call.1} parent=0 // pred_region
    _
  $region13: #{tpu_custom_call.1} parent=0 // pred_fallthru
    _

</llo_original>
